<compile_context>
chip_gen: v7x
topology: tpu7x:2x2x1
jax: 0.10.0
libtpu: 0.0.40
codegen_flags: <defaults>
</compile_context>

<pallas_src>
import functools
import math

import jax
import jax.numpy as jnp
import numpy as np
from jax.experimental import pallas as pl
from jax.experimental.pallas import tpu as pltpu


def _round_up(x, m):
    return (x + m - 1) // m * m


def _largest_tile(n, align, cap):
    """Largest multiple of `align` that divides `n` and is <= cap."""
    best = align
    d = align
    limit = min(n, max(cap, align))
    while d <= limit:
        if n % d == 0:
            best = d
        d += align
    return best


_LOG_LO = math.log(1e-4)
_LOG_HI = math.log(1.0 - 1e-4)


# ---------------------------------------------------------------------------
# Kernel 1: focal loss partial sums over lane-dense [R, HW] tiles
# ---------------------------------------------------------------------------
def _focal_kernel(x_ref, gt_ref, out_ref):
    x = x_ref[...].astype(jnp.float32)
    gt = gt_ref[...].astype(jnp.float32)

    # log(sigmoid(x)) and log(1 - sigmoid(x)) from logits: one exp + one log.
    e = jnp.exp(-jnp.abs(x))
    log1pe = jnp.log(1.0 + e)
    log_p = jnp.minimum(x, 0.0) - log1pe
    log_1mp = jnp.minimum(-x, 0.0) - log1pe
    # _sigmoid's clamp(sigmoid(x), 1e-4, 1 - 1e-4), applied in log space.
    log_p = jnp.clip(log_p, _LOG_LO, _LOG_HI)
    log_1mp = jnp.clip(log_1mp, _LOG_LO, _LOG_HI)

    # p itself (clamped) for the focal modulation terms; reuse e, approx vrcp.
    inv = pl.reciprocal(1.0 + e, approx=True)
    p = jnp.where(x >= 0.0, inv, e * inv)
    p = jnp.clip(p, 1e-4, 1.0 - 1e-4)
    one_m_p = 1.0 - p

    pos_inds = (gt == 1.0).astype(jnp.float32)
    neg_inds = (gt < 1.0).astype(jnp.float32)
    g = 1.0 - gt
    g2 = g * g
    neg_w = g2 * g2                           # (1 - gt)**4 kept on the VPU

    pos_sum = jnp.sum(log_p * one_m_p * one_m_p * pos_inds)
    neg_sum = jnp.sum(log_1mp * p * p * neg_w * neg_inds)
    npos_sum = jnp.sum(pos_inds)

    # Pack all three partials into ONE lane-dense (1,1,1,128) output store.
    lane = jax.lax.broadcasted_iota(jnp.int32, (1, 1, 1, 128), 3)
    out_ref[...] = (jnp.where(lane == 0, pos_sum, 0.0)
                    + jnp.where(lane == 1, neg_sum, 0.0)
                    + jnp.where(lane == 2, npos_sum, 0.0))


def focal_loss(pred_logits, gt):
    B, C, H, W = pred_logits.shape
    R, HW = B * C, H * W
    x = pred_logits.reshape(R, HW)            # free reshape, native dtype
    g = gt.reshape(R, HW)

    R_pad = _round_up(R, 8)
    HW_pad = _round_up(HW, 128)
    if R_pad != R or HW_pad != HW:
        # Only for odd shapes; gt pad value 2.0 -> pos = neg = 0 contribution.
        x = jnp.pad(x, ((0, R_pad - R), (0, HW_pad - HW)))
        g = jnp.pad(g, ((0, R_pad - R), (0, HW_pad - HW)), constant_values=2.0)

    # ~2 MiB per input block (double-buffered x 2 inputs fits every gen,
    # including v7x's 64 MiB VMEM); bf16 inputs get 2x the elements for free.
    TC = _largest_tile(HW_pad, 128, 2048)
    itemsize = max(x.dtype.itemsize, g.dtype.itemsize)
    budget_elems = (2 * 1024 * 1024) // itemsize
    tr_cap = max(8, (budget_elems // TC) // 8 * 8)
    TR = _largest_tile(R_pad, 8, tr_cap)      # divisor of R_pad: no dead rows

    GR, GC = R_pad // TR, HW_pad // TC
    parts = pl.pallas_call(
        _focal_kernel,
        grid=(GR, GC),
        in_specs=[pl.BlockSpec((TR, TC), lambda i, j: (i, j)),
                  pl.BlockSpec((TR, TC), lambda i, j: (i, j))],
        out_specs=pl.BlockSpec((1, 1, 1, 128), lambda i, j: (i, j, 0, 0)),
        out_shape=jax.ShapeDtypeStruct((GR, GC, 1, 128), jnp.float32),
        compiler_params=pltpu.CompilerParams(
            dimension_semantics=("parallel", "parallel"),
            vmem_limit_bytes=32 * 1024 * 1024),
    )(x, g)

    pos = jnp.sum(parts[:, :, 0, 0])
    neg = jnp.sum(parts[:, :, 0, 1])
    npos = jnp.sum(parts[:, :, 0, 2])
    safe_npos = jnp.maximum(npos, 1.0)
    # if num_pos == 0: loss = -neg_loss else: loss = -(pos + neg) / num_pos
    return jnp.where(npos == 0.0, -neg, -(pos + neg) / safe_npos)


# ---------------------------------------------------------------------------
# Kernel 2: fused RegL1 heads via scalar-prefetched direct gather
# ---------------------------------------------------------------------------
def _reg_gather_l1_kernel(nheads, hw, k_pad, ind_ref, mask_ref, *refs):
    feats = refs[:nheads]                      # each (1, HW, C) in VMEM
    tgts = refs[nheads:2 * nheads]             # each (1, K, C)
    out_ref = refs[2 * nheads]                 # (1, 1, 128)
    preds = refs[2 * nheads + 1:]              # VMEM scratch (K, C) per head

    b = pl.program_id(0)

    # Direct gather: per k, one dynamic-sublane read of C lanes.  `ind` lives
    # in SMEM (scalar prefetch) so each index read is a cheap scalar load.
    for k in range(k_pad):
        idx = ind_ref[b, k]
        idx = jnp.minimum(jnp.maximum(idx, 0), hw - 1)   # clamp (no OOB read)
        for h in range(nheads):
            preds[h][pl.ds(k, 1), :] = feats[h][0, pl.ds(idx, 1), :]

    m = mask_ref[0].astype(jnp.float32)        # (K, 1)
    lane = jax.lax.broadcasted_iota(jnp.int32, (1, 1, 128), 2)
    acc = jnp.zeros((1, 1, 128), jnp.float32)
    for h in range(nheads):
        pred = preds[h][...].astype(jnp.float32)         # (K, C)
        tgt = tgts[h][0].astype(jnp.float32)             # (K, C)
        s = jnp.sum(jnp.abs(pred * m - tgt * m))
        acc = acc + jnp.where(lane == h, s, 0.0)
    out_ref[...] = acc                          # lane h = head h partial sum


def reg_l1_losses(feats, targets, mask, ind):
    """Fused RegL1 for 1..N heads sharing mask/ind.  Returns one loss/head."""
    nheads = len(feats)
    B, _, H, W = feats[0].shape
    HW = H * W
    K = ind.shape[1]
    K_pad = _round_up(K, 8)
    chans = [int(f.shape[1]) for f in feats]

    # [B, HW, C] layout puts the gather axis on sublanes; heads are tiny
    # relative to the heatmap so this transpose is negligible HBM traffic.
    feats_t = [f.reshape(B, c, HW).transpose(0, 2, 1)
               for f, c in zip(feats, chans)]
    mask3 = mask.reshape(B, K, 1)
    ind_i = ind.astype(jnp.int32)
    tgts = list(targets)
    if K_pad != K:
        ind_i = jnp.pad(ind_i, ((0, 0), (0, K_pad - K)))
        mask3 = jnp.pad(mask3, ((0, 0), (0, K_pad - K), (0, 0)))
        tgts = [jnp.pad(t, ((0, 0), (0, K_pad - K), (0, 0))) for t in tgts]

    in_specs = [pl.BlockSpec((1, K_pad, 1), lambda b, sref: (b, 0, 0))]
    in_specs += [pl.BlockSpec((1, HW, c), lambda b, sref: (b, 0, 0))
                 for c in chans]
    in_specs += [pl.BlockSpec((1, K_pad, c), lambda b, sref: (b, 0, 0))
                 for c in chans]

    kernel = functools.partial(_reg_gather_l1_kernel, nheads, HW, K_pad)
    out = pl.pallas_call(
        kernel,
        out_shape=jax.ShapeDtypeStruct((B, 1, 128), jnp.float32),
        grid_spec=pltpu.PrefetchScalarGridSpec(
            num_scalar_prefetch=1,
            grid=(B,),
            in_specs=in_specs,
            out_specs=pl.BlockSpec((1, 1, 128), lambda b, sref: (b, 0, 0)),
            scratch_shapes=[pltpu.VMEM((K_pad, c), f.dtype)
                            for f, c in zip(feats_t, chans)]),
        compiler_params=pltpu.CompilerParams(
            dimension_semantics=("parallel",),
            vmem_limit_bytes=32 * 1024 * 1024),
    )(ind_i, mask3, *feats_t, *tgts)

    # Expanded-mask sum = C * sum(mask): tiny reduction, done in plain JAX.
    msum = jnp.sum(mask.astype(jnp.float32))
    return [jnp.sum(out[:, 0, h]) / (msum * c + 1e-4)
            for h, c in enumerate(chans)]


# ---------------------------------------------------------------------------
# CtdetLoss equivalent (no learnable parameters)
# ---------------------------------------------------------------------------
class Opt:
    num_stacks = 1
    hm_weight = 1.0
    wh_weight = 0.1
    off_weight = 1.0
    reg_offset = True
    reg_loss = "l1"


def ctdet_loss(outputs, batch, opt):
    hm_loss = jnp.float32(0.0)
    wh_loss = jnp.float32(0.0)
    off_loss = jnp.float32(0.0)
    need_wh = opt.wh_weight > 0
    need_off = opt.reg_offset and opt.off_weight > 0
    for s in range(opt.num_stacks):
        out = outputs[s]
        hm_loss = hm_loss + focal_loss(out["hm"], batch["hm"]) / opt.num_stacks
        if need_wh and need_off:
            wl, ol = reg_l1_losses([out["wh"], out["reg"]],
                                   [batch["wh"], batch["reg"]],
                                   batch["reg_mask"], batch["ind"])
            wh_loss = wh_loss + wl / opt.num_stacks
            off_loss = off_loss + ol / opt.num_stacks
        elif need_wh:
            wl = reg_l1_losses([out["wh"]], [batch["wh"]],
                               batch["reg_mask"], batch["ind"])[0]
            wh_loss = wh_loss + wl / opt.num_stacks
        elif need_off:
            ol = reg_l1_losses([out["reg"]], [batch["reg"]],
                               batch["reg_mask"], batch["ind"])[0]
            off_loss = off_loss + ol / opt.num_stacks
    loss = (opt.hm_weight * hm_loss + opt.wh_weight * wh_loss
            + opt.off_weight * off_loss)
    loss_stats = {"loss": loss, "hm_loss": hm_loss,
                  "wh_loss": wh_loss, "off_loss": off_loss}
    return loss, loss_stats


# ---------------------------------------------------------------------------
# Pure-JAX reference (faithful translation of the PyTorch module) for checking
# ---------------------------------------------------------------------------
def _ctdet_loss_ref(outputs, batch, opt):
    def focal_ref(x, gt):
        p = jnp.clip(jax.nn.sigmoid(x), 1e-4, 1.0 - 1e-4)
        pos = (gt == 1.0).astype(jnp.float32)
        neg = (gt < 1.0).astype(jnp.float32)
        nw = (1.0 - gt) ** 4
        pos_l = jnp.sum(jnp.log(p) * (1.0 - p) ** 2 * pos)
        neg_l = jnp.sum(jnp.log(1.0 - p) * p ** 2 * nw * neg)
        npos = jnp.sum(pos)
        return jnp.where(npos == 0.0, -neg_l,
                         -(pos_l + neg_l) / jnp.maximum(npos, 1.0))

    def reg_ref(feat, mask, ind, tgt):
        B, C, H, W = feat.shape
        f = feat.reshape(B, C, H * W)
        pred = jnp.take_along_axis(f, ind[:, None, :], axis=2)   # [B, C, K]
        pred = jnp.transpose(pred, (0, 2, 1))                    # [B, K, C]
        m = mask[:, :, None].astype(jnp.float32)
        l1 = jnp.sum(jnp.abs(pred * m - tgt * m))
        return l1 / (jnp.sum(m) * C + 1e-4)

    hm_loss = jnp.float32(0.0)
    wh_loss = jnp.float32(0.0)
    off_loss = jnp.float32(0.0)
    for s in range(opt.num_stacks):
        out = outputs[s]
        hm_loss = hm_loss + focal_ref(out["hm"], batch["hm"]) / opt.num_stacks
        if opt.wh_weight > 0:
            wh_loss = wh_loss + reg_ref(out["wh"], batch["reg_mask"],
                                        batch["ind"], batch["wh"]) / opt.num_stacks
        if opt.reg_offset and opt.off_weight > 0:
            off_loss = off_loss + reg_ref(out["reg"], batch["reg_mask"],
                                          batch["ind"], batch["reg"]) / opt.num_stacks
    loss = (opt.hm_weight * hm_loss + opt.wh_weight * wh_loss
            + opt.off_weight * off_loss)
    return loss, {"loss": loss, "hm_loss": hm_loss,
                  "wh_loss": wh_loss, "off_loss": off_loss}


if __name__ == "__main__":
    key = jax.random.PRNGKey(0)
    B, num_classes, H, W, K = 2, 4, 16, 16, 8
    k1, k2, k3, k4, k5, k6, k7 = jax.random.split(key, 7)

    # Model outputs (raw logits for 'hm'; the loss applies _sigmoid itself).
    hm_logits = jax.random.normal(k1, (B, num_classes, H, W), jnp.float32)
    wh_out = jax.random.normal(k2, (B, 2, H, W), jnp.float32)
    reg_out = jax.random.normal(k3, (B, 2, H, W), jnp.float32)

    # Ground-truth batch.
    hm_gt = jax.random.uniform(k4, (B, num_classes, H, W), jnp.float32, 0.0, 0.9)
    hm_gt = hm_gt.at[:, 0, 4, 4].set(1.0)     # a couple of exact-1 peaks
    hm_gt = hm_gt.at[:, 1, 8, 10].set(1.0)

    ind = jax.random.randint(k5, (B, K), 0, H * W, jnp.int32)
    reg_mask = jnp.concatenate(
        [jnp.ones((B, K // 2), jnp.float32),
         jnp.zeros((B, K - K // 2), jnp.float32)], axis=1)
    wh_tgt = jax.random.uniform(k6, (B, K, 2), jnp.float32, 0.0, 8.0)
    reg_tgt = jax.random.uniform(k7, (B, K, 2), jnp.float32, 0.0, 1.0)

    outputs = [{"hm": hm_logits, "wh": wh_out, "reg": reg_out}]
    batch = {"hm": hm_gt, "reg_mask": reg_mask, "ind": ind,
             "wh": wh_tgt, "reg": reg_tgt}

    opt = Opt()
    loss, stats = ctdet_loss(outputs, batch, opt)
    jax.block_until_ready(loss)

    ref_loss, ref_stats = _ctdet_loss_ref(outputs, batch, opt)
    np.testing.assert_allclose(np.asarray(loss), np.asarray(ref_loss),
                               rtol=5e-3, atol=1e-3)
    for name in ("hm_loss", "wh_loss", "off_loss"):
        np.testing.assert_allclose(np.asarray(stats[name]),
                                   np.asarray(ref_stats[name]),
                                   rtol=5e-3, atol=1e-3)
    print("KERNEL_OK")
</pallas_src>

<mosaic_0001>
module attributes {stable_mosaic.version = 11 : i64} {
  func.func @_focal_kernel(%arg0: i32, %arg1: i32, %arg2: memref<8x256xf32, #tpu.memory_space<vmem>>, %arg3: memref<8x256xf32, #tpu.memory_space<vmem>>, %arg4: memref<1x1x1x128xf32, #tpu.memory_space<vmem>>) attributes {dimension_semantics = [#tpu.dimension_semantics<parallel>, #tpu.dimension_semantics<parallel>], iteration_bounds = array<i64: 1, 1>, scalar_prefetch = 0 : i64, scratch_operands = 0 : i64, tpu.core_type = #tpu.core_type<tc>, window_params = [{transform_indices = @transform_0, window_bounds = array<i64: 8, 256>}, {transform_indices = @transform_1, window_bounds = array<i64: 8, 256>}, {transform_indices = @transform_2, window_bounds = array<i64: 1, 1, 1, 128>}]} {
    %c0 = arith.constant 0 : index
    %c0_0 = arith.constant 0 : index
    %0 = vector.load %arg2[%c0, %c0_0] : memref<8x256xf32, #tpu.memory_space<vmem>>, vector<8x256xf32>
    %c0_1 = arith.constant 0 : index
    %c0_2 = arith.constant 0 : index
    %1 = vector.load %arg3[%c0_1, %c0_2] : memref<8x256xf32, #tpu.memory_space<vmem>>, vector<8x256xf32>
    %2 = math.absf %0 : vector<8x256xf32>
    %cst = arith.constant 0.000000e+00 : f32
    %3 = vector.broadcast %cst : f32 to vector<8x256xf32>
    %4 = arith.subf %3, %2 : vector<8x256xf32>
    %5 = math.exp %4 : vector<8x256xf32>
    %cst_3 = arith.constant 1.000000e+00 : f32
    %6 = vector.broadcast %cst_3 : f32 to vector<8x256xf32>
    %7 = arith.addf %6, %5 : vector<8x256xf32>
    %8 = math.log %7 : vector<8x256xf32>
    %cst_4 = arith.constant 0.000000e+00 : f32
    %9 = vector.broadcast %cst_4 : f32 to vector<8x256xf32>
    %10 = arith.minimumf %0, %9 : vector<8x256xf32>
    %11 = arith.subf %10, %8 : vector<8x256xf32>
    %cst_5 = arith.constant 0.000000e+00 : f32
    %12 = vector.broadcast %cst_5 : f32 to vector<8x256xf32>
    %13 = arith.subf %12, %0 : vector<8x256xf32>
    %cst_6 = arith.constant 0.000000e+00 : f32
    %14 = vector.broadcast %cst_6 : f32 to vector<8x256xf32>
    %15 = arith.minimumf %13, %14 : vector<8x256xf32>
    %16 = arith.subf %15, %8 : vector<8x256xf32>
    %cst_7 = arith.constant -9.21034049 : f32
    %cst_8 = arith.constant -1.000050e-04 : f32
    %17 = vector.broadcast %cst_7 : f32 to vector<8x256xf32>
    %18 = arith.maximumf %17, %11 : vector<8x256xf32>
    %19 = vector.broadcast %cst_8 : f32 to vector<8x256xf32>
    %20 = arith.minimumf %19, %18 : vector<8x256xf32>
    %cst_9 = arith.constant -9.21034049 : f32
    %cst_10 = arith.constant -1.000050e-04 : f32
    %21 = vector.broadcast %cst_9 : f32 to vector<8x256xf32>
    %22 = arith.maximumf %21, %16 : vector<8x256xf32>
    %23 = vector.broadcast %cst_10 : f32 to vector<8x256xf32>
    %24 = arith.minimumf %23, %22 : vector<8x256xf32>
    %cst_11 = arith.constant 1.000000e+00 : f32
    %25 = vector.broadcast %cst_11 : f32 to vector<8x256xf32>
    %26 = arith.addf %25, %5 : vector<8x256xf32>
    %27 = tpu.reciprocal %26 {approx = true} : vector<8x256xf32> -> vector<8x256xf32>
    %cst_12 = arith.constant 0.000000e+00 : f32
    %28 = vector.broadcast %cst_12 : f32 to vector<8x256xf32>
    %29 = arith.cmpf oge, %0, %28 : vector<8x256xf32>
    %30 = arith.mulf %5, %27 : vector<8x256xf32>
    %31 = arith.select %29, %27, %30 : vector<8x256xi1>, vector<8x256xf32>
    %cst_13 = arith.constant 9.99999974E-5 : f32
    %cst_14 = arith.constant 0.999899983 : f32
    %32 = vector.broadcast %cst_13 : f32 to vector<8x256xf32>
    %33 = arith.maximumf %32, %31 : vector<8x256xf32>
    %34 = vector.broadcast %cst_14 : f32 to vector<8x256xf32>
    %35 = arith.minimumf %34, %33 : vector<8x256xf32>
    %cst_15 = arith.constant 1.000000e+00 : f32
    %36 = vector.broadcast %cst_15 : f32 to vector<8x256xf32>
    %37 = arith.subf %36, %35 : vector<8x256xf32>
    %cst_16 = arith.constant 1.000000e+00 : f32
    %38 = vector.broadcast %cst_16 : f32 to vector<8x256xf32>
    %39 = arith.cmpf oeq, %1, %38 : vector<8x256xf32>
    %40 = arith.extui %39 : vector<8x256xi1> to vector<8x256xi32>
    %41 = arith.sitofp %40 : vector<8x256xi32> to vector<8x256xf32>
    %cst_17 = arith.constant 1.000000e+00 : f32
    %42 = vector.broadcast %cst_17 : f32 to vector<8x256xf32>
    %43 = arith.cmpf olt, %1, %42 : vector<8x256xf32>
    %44 = arith.extui %43 : vector<8x256xi1> to vector<8x256xi32>
    %45 = arith.sitofp %44 : vector<8x256xi32> to vector<8x256xf32>
    %cst_18 = arith.constant 1.000000e+00 : f32
    %46 = vector.broadcast %cst_18 : f32 to vector<8x256xf32>
    %47 = arith.subf %46, %1 : vector<8x256xf32>
    %48 = arith.mulf %47, %47 : vector<8x256xf32>
    %49 = arith.mulf %48, %48 : vector<8x256xf32>
    %50 = arith.mulf %20, %37 : vector<8x256xf32>
    %51 = arith.mulf %50, %37 : vector<8x256xf32>
    %52 = arith.mulf %51, %41 : vector<8x256xf32>
    %53 = vector.shape_cast %52 : vector<8x256xf32> to vector<1x8x256xf32>
    %cst_19 = arith.constant dense<0.000000e+00> : vector<1xf32>
    %54 = vector.multi_reduction <add>, %53, %cst_19 [1, 2] : vector<1x8x256xf32> to vector<1xf32>
    %55 = vector.shape_cast %54 : vector<1xf32> to vector<1x1x1xf32>
    %56 = vector.extract %55[0, 0, 0] : f32 from vector<1x1x1xf32>
    %57 = arith.mulf %24, %35 : vector<8x256xf32>
    %58 = arith.mulf %57, %35 : vector<8x256xf32>
    %59 = arith.mulf %58, %49 : vector<8x256xf32>
    %60 = arith.mulf %59, %45 : vector<8x256xf32>
    %61 = vector.shape_cast %60 : vector<8x256xf32> to vector<1x8x256xf32>
    %cst_20 = arith.constant dense<0.000000e+00> : vector<1xf32>
    %62 = vector.multi_reduction <add>, %61, %cst_20 [1, 2] : vector<1x8x256xf32> to vector<1xf32>
    %63 = vector.shape_cast %62 : vector<1xf32> to vector<1x1x1xf32>
    %64 = vector.extract %63[0, 0, 0] : f32 from vector<1x1x1xf32>
    %65 = vector.shape_cast %41 : vector<8x256xf32> to vector<1x8x256xf32>
    %cst_21 = arith.constant dense<0.000000e+00> : vector<1xf32>
    %66 = vector.multi_reduction <add>, %65, %cst_21 [1, 2] : vector<1x8x256xf32> to vector<1xf32>
    %67 = vector.shape_cast %66 : vector<1xf32> to vector<1x1x1xf32>
    %68 = vector.extract %67[0, 0, 0] : f32 from vector<1x1x1xf32>
    %69 = tpu.iota {dimensions = array<i32: 3>} : vector<1x1x1x128xi32>
    %c0_i32 = arith.constant 0 : i32
    %70 = vector.broadcast %c0_i32 : i32 to vector<1x1x1x128xi32>
    %71 = arith.cmpi eq, %69, %70 : vector<1x1x1x128xi32>
    %cst_22 = arith.constant 0.000000e+00 : f32
    %72 = vector.broadcast %56 : f32 to vector<1x1x1x128xf32>
    %73 = vector.broadcast %cst_22 : f32 to vector<1x1x1x128xf32>
    %74 = arith.select %71, %72, %73 : vector<1x1x1x128xi1>, vector<1x1x1x128xf32>
    %c1_i32 = arith.constant 1 : i32
    %75 = vector.broadcast %c1_i32 : i32 to vector<1x1x1x128xi32>
    %76 = arith.cmpi eq, %69, %75 : vector<1x1x1x128xi32>
    %cst_23 = arith.constant 0.000000e+00 : f32
    %77 = vector.broadcast %64 : f32 to vector<1x1x1x128xf32>
    %78 = vector.broadcast %cst_23 : f32 to vector<1x1x1x128xf32>
    %79 = arith.select %76, %77, %78 : vector<1x1x1x128xi1>, vector<1x1x1x128xf32>
    %80 = arith.addf %74, %79 : vector<1x1x1x128xf32>
    %c2_i32 = arith.constant 2 : i32
    %81 = vector.broadcast %c2_i32 : i32 to vector<1x1x1x128xi32>
    %82 = arith.cmpi eq, %69, %81 : vector<1x1x1x128xi32>
    %cst_24 = arith.constant 0.000000e+00 : f32
    %83 = vector.broadcast %68 : f32 to vector<1x1x1x128xf32>
    %84 = vector.broadcast %cst_24 : f32 to vector<1x1x1x128xf32>
    %85 = arith.select %82, %83, %84 : vector<1x1x1x128xi1>, vector<1x1x1x128xf32>
    %86 = arith.addf %80, %85 : vector<1x1x1x128xf32>
    %c0_25 = arith.constant 0 : index
    %c0_26 = arith.constant 0 : index
    %c0_27 = arith.constant 0 : index
    %c0_28 = arith.constant 0 : index
    %87 = vector.load %arg4[%c0_25, %c0_26, %c0_27, %c0_28] : memref<1x1x1x128xf32, #tpu.memory_space<vmem>>, vector<1x1x1x128xf32>
    tpu.vector_store %arg4[%c0_25, %c0_26, %c0_27, %c0_28], %86 {strides = array<i32>} : memref<1x1x1x128xf32, #tpu.memory_space<vmem>>, vector<1x1x1x128xf32>,
    return
  }
  func.func @transform_0(%arg0: i32, %arg1: i32) -> (i32, i32) {
    %c0_i32 = arith.constant 0 : i32
    return %arg0, %arg1 : i32, i32
  }
  func.func @transform_1(%arg0: i32, %arg1: i32) -> (i32, i32) {
    %c0_i32 = arith.constant 0 : i32
    return %arg0, %arg1 : i32, i32
  }
  func.func @transform_2(%arg0: i32, %arg1: i32) -> (i32, i32, i32, i32) {
    %c0_i32 = arith.constant 0 : i32
    %c0_i32_0 = arith.constant 0 : i32
    %c0_i32_1 = arith.constant 0 : i32
    return %arg0, %arg1, %c0_i32, %c0_i32_0 : i32, i32, i32, i32
  }
}

</mosaic_0001>

<llo_original>
// kernel: tpu_custom_call.1
$region0: #{tpu_custom_call.1}
  #allocation0 [shape = 'u32[]', space=smem, size = 0x4, offset = 0x4, fixed_abs, tag = 'smem constant byte address 0x4 - core index']
  #allocation1 [shape = 'u32[144,128]{1,0:T(1,128)}', space=vmem, size = 0x12000, scoped, tag = 'internal scratch']
  %s0 = inlined_call_operand.hbm [shape: f32[8,256], index: 0, kind: input, shape index: {}]
  %s1 = inlined_call_operand.hbm [shape: f32[8,256], index: 1, kind: input, shape index: {}]
  %s2 = inlined_call_operand.hbm [shape: f32[1,1,1,128], index: 2, kind: output, shape index: {}]
  %s3 = sld [smem:[#allocation0]]
  $region26: #{tpu_custom_call.1} parent=0
    _
  %s5 = ssub.s32 1, %s3
  %s6 = scalar_select 0, %s5, %s3
  $region1: #{tpu_custom_call.1} parent=0
    #allocation2 [shape = 'u8[8192]{0}', space=vmem, size = 0x2000, scoped, tag = 'input window, operand 0, single buffered']
    #allocation3 [shape = 's32[1]{0}', space=sflag, size = 0x4, scoped, tag = 'scoped memory for tpu_custom_call.1']
    #allocation4 [shape = 's32[1]{0}', space=sflag, size = 0x4, scoped, tag = 'scoped memory for tpu_custom_call.1']
    #allocation5 [shape = 'u8[8192]{0}', space=vmem, size = 0x2000, scoped, tag = 'input window, operand 1, single buffered']
    #allocation6 [shape = 's32[1]{0}', space=sflag, size = 0x4, scoped, tag = 'scoped memory for tpu_custom_call.1']
    #allocation7 [shape = 'u8[512]{0}', space=vmem, size = 0x400, scoped, tag = 'output window, operand 0, single buffered']
    %7 = vsyncpa [#allocation3], 0
    %8 = vsyncpa [#allocation6], 0
    %9 = vsyncpa [#allocation4], 0
    // Predicated region
    $region2: #{tpu_custom_call.1} parent=1 // pred_check
      _
    $region3: #{tpu_custom_call.1} parent=1 // pred_check_branch
      %11 = sbr.rel (0) target = $region5
    $region4: #{tpu_custom_call.1} parent=1 // pred_region
      %s13 = ssub.s32 256, 256
      %14 = vsyncadd [#allocation3], %s13
      %s16 = sshll.u32 [#allocation2], 4
      %s17 = int_to_ptr.vmem [resolvable:$true] %s16
      %19 = dma.hbm_to_vmem [thread:$0]  %s0, 256, %s17, [#allocation3]
    $region5: #{tpu_custom_call.1} parent=1 // pred_fallthru
      _
    // Predicated region
    $region6: #{tpu_custom_call.1} parent=1 // pred_check
      _
    $region7: #{tpu_custom_call.1} parent=1 // pred_check_branch
      %21 = sbr.rel (0) target = $region9
    $region8: #{tpu_custom_call.1} parent=1 // pred_region
      %s23 = ssub.s32 256, 256
      %24 = vsyncadd [#allocation6], %s23
      %s26 = sshll.u32 [#allocation5], 4
      %s27 = int_to_ptr.vmem [resolvable:$true] %s26
      %29 = dma.hbm_to_vmem [thread:$0]  %s1, 256, %s27, [#allocation6]
    $region9: #{tpu_custom_call.1} parent=1 // pred_fallthru
      _
    // Predicated region
    $region10: #{tpu_custom_call.1} parent=1 // pred_check
      _
    $region11: #{tpu_custom_call.1} parent=1 // pred_check_branch
      %31 = sbr.rel (0) target = $region13
    $region12: #{tpu_custom_call.1} parent=1 // pred_region
      %32 = dma.done [#allocation3], 256
    $region13: #{tpu_custom_call.1} parent=1 // pred_fallthru
      _
    // Predicated region
    $region14: #{tpu_custom_call.1} parent=1 // pred_check
      _
    $region15: #{tpu_custom_call.1} parent=1 // pred_check_branch
      %34 = sbr.rel (0) target = $region17
    $region16: #{tpu_custom_call.1} parent=1 // pred_region
      %35 = dma.done [#allocation6], 256
    $region17: #{tpu_custom_call.1} parent=1 // pred_fallthru
      _
    %v36 = vld [vmem:[#allocation2] sm:$0xff]
    %v37 = vld [vmem:[#allocation2 + $0x8] sm:$0xff]
    %v38 = vld [vmem:[#allocation5] sm:$0xff]
    %v39 = vld [vmem:[#allocation5 + $0x8] sm:$0xff]
    %v40 = vand.u32 2147483647, %v36
    %v41 = vand.u32 2147483647, %v37
    %v42 = vsub.f32 0.0, %v40
    %v43 = vsub.f32 0.0, %v41
    %v44 = vmul.f32 %v42, 1.442695
    %v45 = vpow.pop %v44
    %v46 = vmul.f32 %v43, 1.442695
    %v47 = vpow.pop %v46
    %v48 = vadd.f32 %v45, 1.0
    %v49 = vadd.f32 %v47, 1.0
    %v50 = vlog2.pop %v48
    %v51 = vmul.f32 %v50, 0.6931472
    %v52 = vlog2.pop %v49
    %v53 = vmul.f32 %v52, 0.6931472
    %v54 = vmin.f32 %v36, 0.0
    %v55 = vmin.f32 %v37, 0.0
    %v56 = vsub.f32 %v54, %v51
    %v57 = vsub.f32 %v55, %v53
    %v58 = vsub.f32 0.0, %v36
    %v59 = vsub.f32 0.0, %v37
    %v60 = vmin.f32 %v58, 0.0
    %v61 = vmin.f32 %v59, 0.0
    %v62 = vsub.f32 %v60, %v51
    %v63 = vsub.f32 %v61, %v53
    %v64 = vmax.f32 %v56, -9.2103405
    %v65 = vmax.f32 %v57, -9.2103405
    %v66 = vmin.f32 %v64, -0.000100005
    %v67 = vmin.f32 %v65, -0.000100005
    %v68 = vmax.f32 %v62, -9.2103405
    %v69 = vmax.f32 %v63, -9.2103405
    %v70 = vmin.f32 %v68, -0.000100005
    %v71 = vmin.f32 %v69, -0.000100005
    %v72 = vrcp.pop %v48
    %v73 = vrcp.pop %v49
    %vm74 = vcmp.ge.f32.partialorder %v36, 0.0
    %vm75 = vcmp.ge.f32.partialorder %v37, 0.0
    %v76 = vmul.f32 %v45, %v72
    %v77 = vmul.f32 %v47, %v73
    %v78 = vsel %vm74, %v72, %v76
    %v79 = vsel %vm75, %v73, %v77
    %v80 = vmax.f32 %v78, 0.0001
    %v81 = vmax.f32 %v79, 0.0001
    %v82 = vmin.f32 %v80, 0.9999
    %v83 = vmin.f32 %v81, 0.9999
    %v84 = vsub.f32 1.0, %v82
    %v85 = vsub.f32 1.0, %v83
    %vm86 = vcmp.eq.f32.partialorder %v38, 1.0
    %vm87 = vcmp.eq.f32.partialorder %v39, 1.0
    %v88 = vsel %vm86, 1, 0
    %v89 = vsel %vm87, 1, 0
    %v90 = vcvt.s32.f32 %v88
    %v91 = vcvt.s32.f32 %v89
    %vm92 = vcmp.lt.f32.partialorder %v38, 1.0
    %vm93 = vcmp.lt.f32.partialorder %v39, 1.0
    %v94 = vsel %vm92, 1, 0
    %v95 = vsel %vm93, 1, 0
    %v96 = vcvt.s32.f32 %v94
    %v97 = vcvt.s32.f32 %v95
    %v98 = vsub.f32 1.0, %v38
    %v99 = vsub.f32 1.0, %v39
    %v100 = vmul.f32 %v98, %v98
    %v101 = vmul.f32 %v99, %v99
    %v102 = vmul.f32 %v100, %v100
    %v103 = vmul.f32 %v101, %v101
    %v104 = vmul.f32 %v66, %v84
    %v105 = vmul.f32 %v67, %v85
    %v106 = vmul.f32 %v104, %v84
    %v107 = vmul.f32 %v105, %v85
    %v108 = vmul.f32 %v106, %v90
    %v109 = vmul.f32 %v107, %v91
    %v110 = vadd.f32 %v108, %v109
    %111 = vadd.xlane.f32.xlu0 %v110
    %v112 = vpop.xlane.xlu0 %111
    %v113 = vrot.slane %v112, 4
    %v114 = vadd.f32 %v112, %v113
    %v115 = vrot.slane %v114, 2
    %v116 = vadd.f32 %v114, %v115
    %v117 = vrot.slane %v116, 1
    %v118 = vadd.f32 %v116, %v117
    %s119 = vtos %v118
    %v120 = vmul.f32 %v70, %v82
    %v121 = vmul.f32 %v71, %v83
    %v122 = vmul.f32 %v120, %v82
    %v123 = vmul.f32 %v121, %v83
    %v124 = vmul.f32 %v122, %v102
    %v125 = vmul.f32 %v123, %v103
    %v126 = vmul.f32 %v124, %v96
    %v127 = vmul.f32 %v125, %v97
    %v128 = vadd.f32 %v126, %v127
    %129 = vadd.xlane.f32.xlu0 %v128
    %v130 = vpop.xlane.xlu0 %129
    %v131 = vrot.slane %v130, 4
    %v132 = vadd.f32 %v130, %v131
    %v133 = vrot.slane %v132, 2
    %v134 = vadd.f32 %v132, %v133
    %v135 = vrot.slane %v134, 1
    %v136 = vadd.f32 %v134, %v135
    %s137 = vtos %v136
    %v138 = vadd.f32 %v90, %v91
    %139 = vadd.xlane.f32.xlu0 %v138
    %v140 = vpop.xlane.xlu0 %139
    %v141 = vrot.slane %v140, 4
    %v142 = vadd.f32 %v140, %v141
    %v143 = vrot.slane %v142, 2
    %v144 = vadd.f32 %v142, %v143
    %v145 = vrot.slane %v144, 1
    %v146 = vadd.f32 %v144, %v145
    %s147 = vtos %v146
    %v148 = vlaneseq
    %v149 = vand.u32 %v148, 127
    %vm150 = vcmp.eq.s32.totalorder %v149, 0
    %v151 = vstv %s119
    %v152 = vsel %vm150, %v151, 0.0
    %vm153 = vcmp.eq.s32.totalorder %v149, 1
    %v154 = vstv %s137
    %v155 = vsel %vm153, %v154, 0.0
    %v156 = vadd.f32 %v152, %v155
    %vm157 = vcmp.eq.s32.totalorder %v149, 2
    %v158 = vstv %s147
    %v159 = vsel %vm157, %v158, 0.0
    %v160 = vadd.f32 %v156, %v159
    %161 = vst [vmem:[#allocation7] sm:$0x1] %v160
    // Predicated region
    $region18: #{tpu_custom_call.1} parent=1 // pred_check
      _
    $region19: #{tpu_custom_call.1} parent=1 // pred_check_branch
      %163 = sbr.rel (0) target = $region21
    $region20: #{tpu_custom_call.1} parent=1 // pred_region
      %s165 = ssub.s32 16, 16
      %166 = vsyncadd [#allocation4], %s165
      %s168 = sshll.u32 [#allocation7], 4
      %s169 = int_to_ptr.vmem [resolvable:$true] %s168
      %171 = dma.vmem_to_hbm [thread:$0]  %s169, 16, %s2, [#allocation4]
    $region21: #{tpu_custom_call.1} parent=1 // pred_fallthru
      _
    // Predicated region
    $region22: #{tpu_custom_call.1} parent=1 // pred_check
      _
    $region23: #{tpu_custom_call.1} parent=1 // pred_check_branch
      %173 = sbr.rel (0) target = $region25
    $region24: #{tpu_custom_call.1} parent=1 // pred_region
      %174 = dma.done [#allocation4], 16
    $region25: #{tpu_custom_call.1} parent=1 // pred_fallthru
      _
    %175 = vsyncpa [#allocation3], 1
    %176 = vsyncpa [#allocation6], 1
    %177 = vsyncpa [#allocation4], 1

</llo_original>
